<compile_context>
chip_gen: v7x
topology: tpu7x:2x2x1
jax: 0.10.0
libtpu: 0.0.40
codegen_flags: <defaults>
</compile_context>

<pallas_src>
import math
import functools

import numpy as np
import jax
import jax.numpy as jnp
from jax.experimental import pallas as pl
from jax.experimental.pallas import tpu as pltpu


def _timestep_embed_kernel(t_ref, omega_ref, out_ref, *, half: int,
                           flip_sin_to_cos: bool):
    # t_ref:     (TM, 1)    float32 — flattened timesteps as a sublane column
    # omega_ref: (1, half)  float32 — precomputed frequencies (lane row)
    # out_ref:   (TM, 2*half) float32 — sincos embedding
    arg = t_ref[...] * omega_ref[...]          # (TM, half) == outer(t, omega)
    emb_sin = jnp.sin(arg)
    emb_cos = jnp.cos(arg)

    # Direct slice stores: the flip is store-address selection, not data
    # movement (no lane-axis concatenate / XLU relayout).
    if flip_sin_to_cos:
        out_ref[:, :half] = emb_cos
        out_ref[:, half:] = emb_sin
    else:
        out_ref[:, :half] = emb_sin
        out_ref[:, half:] = emb_cos


class SkyReelsV2TimestepsPallas:
    """JAX/Pallas equivalent of SkyReelsV2Timesteps (output_type='pt')."""

    # Above this many flattened timesteps, tile over M instead of one block.
    _TM = 512  # multiple of 8; (TM, D) f32 tiles stay tiny even for D=1024

    def __init__(self, num_channels: int, flip_sin_to_cos: bool):
        assert num_channels % 2 == 0, "embed_dim must be divisible by 2"
        self.num_channels = num_channels
        self.flip_sin_to_cos = flip_sin_to_cos
        half = num_channels // 2
        # omega computed in float64 like the diffusers reference, then cast.
        omega64 = np.exp(
            np.arange(half, dtype=np.float64) * (-math.log(10000.0) / float(half))
        )
        self._omega = jnp.asarray(omega64.astype(np.float32).reshape(1, half))

    def __call__(self, timesteps: jax.Array) -> jax.Array:
        original_shape = timesteps.shape
        t_flat = timesteps.reshape(-1).astype(jnp.float32)
        m = t_flat.shape[0]
        d = self.num_channels
        half = d // 2

        kernel = functools.partial(
            _timestep_embed_kernel, half=half,
            flip_sin_to_cos=self.flip_sin_to_cos,
        )

        if m <= self._TM:
            # Small M: one whole-array block, no grid machinery at all.
            t_col = t_flat.reshape(m, 1)
            emb = pl.pallas_call(
                kernel,
                out_shape=jax.ShapeDtypeStruct((m, d), jnp.float32),
                in_specs=[
                    pl.BlockSpec(memory_space=pltpu.MemorySpace.VMEM),
                    pl.BlockSpec(memory_space=pltpu.MemorySpace.VMEM),
                ],
                out_specs=pl.BlockSpec(memory_space=pltpu.MemorySpace.VMEM),
            )(t_col, self._omega)
        else:
            # Large M: 8-aligned parallel tiling over M (double-buffered DMA,
            # core-shardable on multi-TC parts).
            tm = self._TM
            m_pad = pl.cdiv(m, tm) * tm
            t_col = jnp.pad(t_flat, (0, m_pad - m)).reshape(m_pad, 1)
            emb = pl.pallas_call(
                kernel,
                out_shape=jax.ShapeDtypeStruct((m_pad, d), jnp.float32),
                grid=(m_pad // tm,),
                in_specs=[
                    pl.BlockSpec((tm, 1), lambda i: (i, 0)),
                    pl.BlockSpec((1, half), lambda i: (0, 0)),
                ],
                out_specs=pl.BlockSpec((tm, d), lambda i: (i, 0)),
                compiler_params=pltpu.CompilerParams(
                    dimension_semantics=("parallel",)),
            )(t_col, self._omega)
            emb = emb[:m]

        if len(original_shape) > 1:
            emb = emb.reshape(*original_shape, d)
        return emb


def _reference_jax(timesteps, num_channels, flip_sin_to_cos):
    """Pure-JAX reference mirroring the PyTorch implementation
    (omega in float64, math in float32 on TPU)."""
    original_shape = timesteps.shape
    half = num_channels // 2
    omega64 = 1.0 / (10000.0 ** (np.arange(half, dtype=np.float64) / float(half)))
    omega = jnp.asarray(omega64.astype(np.float32))
    pos = timesteps.reshape(-1).astype(jnp.float32)
    out = jnp.outer(pos, omega)
    emb_sin = jnp.sin(out)
    emb_cos = jnp.cos(out)
    emb = jnp.concatenate([emb_sin, emb_cos], axis=1)
    if flip_sin_to_cos:
        emb = jnp.concatenate([emb[:, half:], emb[:, :half]], axis=1)
    if len(original_shape) > 1:
        emb = emb.reshape(*original_shape, num_channels)
    return emb


if __name__ == "__main__":
    key = jax.random.PRNGKey(0)

    num_channels = 32
    flip_sin_to_cos = True

    # Batched timesteps (batch=2, seq=8), values in [0, 1000) like diffusion steps.
    timesteps = jax.random.uniform(
        key, (2, 8), dtype=jnp.float32, minval=0.0, maxval=1000.0
    )

    module = SkyReelsV2TimestepsPallas(num_channels, flip_sin_to_cos)
    out = module(timesteps)
    out = jax.block_until_ready(out)

    assert out.shape == (2, 8, num_channels), out.shape
    assert out.dtype == jnp.float32, out.dtype

    ref = _reference_jax(timesteps, num_channels, flip_sin_to_cos)
    assert jnp.allclose(out, ref, atol=1e-5, rtol=1e-5), "mismatch vs reference"

    # Also exercise the non-flipped variant and a 1-D input path.
    module2 = SkyReelsV2TimestepsPallas(num_channels, False)
    t1d = jnp.linspace(0.0, 999.0, 8, dtype=jnp.float32)
    out2 = jax.block_until_ready(module2(t1d))
    ref2 = _reference_jax(t1d, num_channels, False)
    assert out2.shape == (8, num_channels)
    assert jnp.allclose(out2, ref2, atol=1e-5, rtol=1e-5), "mismatch (no flip)"

    print("KERNEL_OK")
</pallas_src>

<mosaic_0001>
module attributes {stable_mosaic.version = 11 : i64} {
  func.func @_timestep_embed_kernel(%arg0: memref<16x1xf32, #tpu.memory_space<vmem>>, %arg1: memref<1x16xf32, #tpu.memory_space<vmem>>, %arg2: memref<16x32xf32, #tpu.memory_space<vmem>>) attributes {dimension_semantics = [], scalar_prefetch = 0 : i64, scratch_operands = 0 : i64, tpu.core_type = #tpu.core_type<tc>} {
    %c0 = arith.constant 0 : index
    %c0_0 = arith.constant 0 : index
    %0 = vector.load %arg0[%c0, %c0_0] : memref<16x1xf32, #tpu.memory_space<vmem>>, vector<16x1xf32>
    %c0_1 = arith.constant 0 : index
    %c0_2 = arith.constant 0 : index
    %1 = vector.load %arg1[%c0_1, %c0_2] : memref<1x16xf32, #tpu.memory_space<vmem>>, vector<1x16xf32>
    %2 = vector.broadcast %0 : vector<16x1xf32> to vector<16x16xf32>
    %3 = vector.broadcast %1 : vector<1x16xf32> to vector<16x16xf32>
    %4 = arith.mulf %2, %3 : vector<16x16xf32>
    %5 = math.sin %4 : vector<16x16xf32>
    %6 = math.cos %4 : vector<16x16xf32>
    %c0_3 = arith.constant 0 : index
    %c0_4 = arith.constant 0 : index
    %7 = vector.load %arg2[%c0_3, %c0_4] : memref<16x32xf32, #tpu.memory_space<vmem>>, vector<16x16xf32>
    tpu.vector_store %arg2[%c0_3, %c0_4], %6 {strides = array<i32>} : memref<16x32xf32, #tpu.memory_space<vmem>>, vector<16x16xf32>,
    %c0_5 = arith.constant 0 : index
    %c16 = arith.constant 16 : index
    %8 = vector.load %arg2[%c0_5, %c16] : memref<16x32xf32, #tpu.memory_space<vmem>>, vector<16x16xf32>
    tpu.vector_store %arg2[%c0_5, %c16], %5 {strides = array<i32>} : memref<16x32xf32, #tpu.memory_space<vmem>>, vector<16x16xf32>,
    return
  }
}

</mosaic_0001>

<llo_original>
// kernel: tpu_custom_call.1
$region0: #{tpu_custom_call.1}
  #allocation0 [shape = 'u32[]', space=smem, size = 0x4, offset = 0x4, fixed_abs, tag = 'smem constant byte address 0x4 - core index']
  #allocation1 [shape = 'u32[144,128]{1,0:T(1,128)}', space=vmem, size = 0x12000, scoped, tag = 'internal scratch']
  %s0 = inlined_call_operand.vmem [shape: f32[16,1], index: 0, kind: input, shape index: {}]
  %s1 = inlined_call_operand.vmem [shape: f32[1,16], index: 1, kind: input, shape index: {}]
  %s2 = inlined_call_operand.hbm [shape: f32[16,32], index: 2, kind: output, shape index: {}]
  %s3 = sld [smem:[#allocation0]]
  $region18: #{tpu_custom_call.1} parent=0
    _
  %s5 = ssub.s32 1, %s3
  %s6 = scalar_select 0, %s5, %s3
  $region1: #{tpu_custom_call.1} parent=0
    #allocation2 [shape = 'u8[8192]{0}', space=vmem, size = 0x2000, scoped, tag = 'output window, operand 0, single buffered']
    #allocation3 [shape = 's32[1]{0}', space=sflag, size = 0x4, scoped, tag = 'scoped memory for tpu_custom_call.1']
    %7 = vsyncpa [#allocation3], 0
    // Predicated region
    $region2: #{tpu_custom_call.1} parent=1 // pred_check
      _
    $region3: #{tpu_custom_call.1} parent=1 // pred_check_branch
      %9 = sbr.rel (0) target = $region5
    $region4: #{tpu_custom_call.1} parent=1 // pred_region
      _
    $region5: #{tpu_custom_call.1} parent=1 // pred_fallthru
      _
    // Predicated region
    $region6: #{tpu_custom_call.1} parent=1 // pred_check
      _
    $region7: #{tpu_custom_call.1} parent=1 // pred_check_branch
      %11 = sbr.rel (0) target = $region9
    $region8: #{tpu_custom_call.1} parent=1 // pred_region
      _
    $region9: #{tpu_custom_call.1} parent=1 // pred_fallthru
      _
    %v12 = vld [vmem:[%s0] sm:$0xff]
    %v13 = vld [vmem:[%s0 + $0x8] sm:$0xff]
    %v14 = vld [vmem:[%s1] sm:$0x1]
    %16 = vset.pattern.permute.xlu0 0
    %17 = vperm.xlu0 %16, %v12
    %v18 = vpop.permute.xlu0 %17
    %21 = vset.pattern.permute.xlu0 0
    %22 = vperm.xlu0 %21, %v13
    %v23 = vpop.permute.xlu0 %22
    %v26 = vlaneseq
    %v27 = vshrl.u32 %v26, 7
    %v28 = vsub.s32 0, %v27
    %v29 = vrot.slane %v14, %v28
    %v31 = vmul.f32 %v18, %v29
    %v32 = vmul.f32 %v23, %v29
    %v33 = vand.u32 2147483647, %v31
    %vm34 = vcmp.le.f32.partialorder %v33, 0.7853982
    %vm35 = vcmp.lt.s32.totalorder %v31, 0
    %v36 = vand.u32 %v31, 2139095040
    %v37 = vshrl.u32 %v36, 23
    %v38 = vsub.s32 %v37, 127
    %v39 = vand.u32 2147483647, %v31
    %v40 = vand.u32 %v39, 8388607
    %v41 = vor.u32 %v40, 8388608
    %v42 = vsub.s32 0, %v41
    %v43 = vadd.s32 %v38, 1
    %vm44 = vcmp.gt.s32.totalorder %v43, 0
    %v45 = vsel %vm44, %v43, 0
    %v46 = vshrl.u32 %v45, 5
    %v47 = vand.u32 %v45, 31
    %v48 = vsub.s32 32, %v47
    %v49 = vshrl.u32 683565275, %v48
    %v50 = vshll.u32 683565275, %v47
    %v51 = vshrl.u32 2475754826, %v48
    %v52 = vor.u32 %v50, %v51
    %v53 = vshll.u32 2475754826, %v47
    %v54 = vshrl.u32 2131351028, %v48
    %v55 = vor.u32 %v53, %v54
    %v56 = vshll.u32 2131351028, %v47
    %v57 = vshrl.u32 2102212464, %v48
    %v58 = vor.u32 %v56, %v57
    %v59 = vshll.u32 2102212464, %v47
    %v60 = vshrl.u32 920167782, %v48
    %v61 = vor.u32 %v59, %v60
    %v62 = vshll.u32 920167782, %v47
    %v63 = vshrl.u32 1326507024, %v48
    %v64 = vor.u32 %v62, %v63
    %vm65 = vcmp.lt.s32.totalorder %v46, 1
    %vm66 = vcmp.lt.s32.totalorder %v46, 2
    %vm67 = vcmp.lt.s32.totalorder %v46, 3
    %vm68 = vcmp.lt.s32.totalorder %v46, 4
    %v69 = vsel %vm65, %v49, %v52
    %v70 = vsel %vm68, %v58, 2102212464
    %v71 = vsel %vm67, %v55, %v70
    %v72 = vsel %vm66, %v69, %v71
    %v73 = vsel %vm65, %v52, %v55
    %v74 = vsel %vm68, %v61, 920167782
    %v75 = vsel %vm67, %v58, %v74
    %v76 = vsel %vm66, %v73, %v75
    %v77 = vsel %vm65, %v55, %v58
    %v78 = vsel %vm68, %v64, 1326507024
    %v79 = vsel %vm67, %v61, %v78
    %v80 = vsel %vm66, %v77, %v79
    %v81 = vshll.u32 %v41, 8
    %v82 = vmul.u32.u64.compose %v81, %v80
    %v83 = vextract.low.u32 %v82
    %v84 = vextract.high.u32 %v82
    %v85 = vmul.u32.u64.compose %v81, %v76
    %v86 = vextract.low.u32 %v85
    %v87 = vextract.high.u32 %v85
    %v88 = vmul.u32 %v81, %v72
    %v89 = vadd.s32 %v84, %v86
    %vm90 = vc.u32 %v84, %v86
    %v91 = vadd.s32 %v87, 1
    %v92 = vsel %vm90, %v91, %v87
    %v93 = vadd.s32 %v88, %v92
    %v94 = vadd.s32 %v93, 536870912
    %v95 = vshrl.u32 %v94, 30
    %v96 = vshll.u32 %v95, 30
    %v97 = vsub.s32 %v93, %v96
    %vm98 = vcmp.lt.s32.totalorder %v97, 0
    %v99 = vsub.s32 0, %v97
    %v100 = vsel %vm98, %v99, %v97
    %v101 = vclz %v100
    %v102 = vsub.s32 %v101, 2
    %vm103 = vcmp.gt.s32.totalorder 0, %v102
    %v104 = vsel %vm103, 0, %v102
    %v105 = vsub.s32 32, %v104
    %v106 = vshll.u32 %v97, %v104
    %v107 = vshrl.u32 %v89, %v105
    %v108 = vor.u32 %v106, %v107
    %v109 = vsub.s32 4294967266, %v104
    %v110 = vadd.s32 %v109, 127
    %v111 = vshll.u32 %v110, 23
    %v112 = vor.u32 4788187, %v111
    %v113 = vand.u32 2147483647, %v112
    %v115 = vcvt.s32.f32 %v108
    %v116 = vmul.f32 %v115, %v113
    %v117 = vxor.u32 %v116, 2147483648
    %v118 = vsel %vm35, %v117, %v116
    %v119 = vsub.s32 4, %v95
    %v120 = vsel %vm35, %v119, %v95
    %v121 = vsel %vm34, %v31, %v118
    %v122 = vsel %vm34, 0, %v120
    %v123 = vcosq.f32.pop %v121
    %v124 = vsinq.f32.pop %v121
    %vm125 = vweird.f32 %v31
    %v126 = vadd.s32 %v122, 3
    %v127 = vand.u32 %v126, 3
    %vm128 = vcmp.lt.s32.totalorder %v127, 2
    %vm129 = vcmp.eq.s32.totalorder %v127, 0
    %v130 = vxor.u32 %v124, 2147483648
    %v131 = vsel %vm129, %v123, %v130
    %vm132 = vcmp.eq.s32.totalorder %v127, 2
    %v133 = vxor.u32 %v123, 2147483648
    %v134 = vsel %vm132, %v133, %v124
    %v135 = vsel %vm128, %v131, %v134
    %v136 = vsel %vm125, nan, %v135
    %v137 = vand.u32 2147483647, %v32
    %vm138 = vcmp.le.f32.partialorder %v137, 0.7853982
    %vm139 = vcmp.lt.s32.totalorder %v32, 0
    %v140 = vand.u32 %v32, 2139095040
    %v141 = vshrl.u32 %v140, 23
    %v142 = vsub.s32 %v141, 127
    %v143 = vand.u32 2147483647, %v32
    %v144 = vand.u32 %v143, 8388607
    %v145 = vor.u32 %v144, 8388608
    %v146 = vsub.s32 0, %v145
    %v147 = vadd.s32 %v142, 1
    %vm148 = vcmp.gt.s32.totalorder %v147, 0
    %v149 = vsel %vm148, %v147, 0
    %v150 = vshrl.u32 %v149, 5
    %v151 = vand.u32 %v149, 31
    %v152 = vsub.s32 32, %v151
    %v153 = vshrl.u32 683565275, %v152
    %v154 = vshll.u32 683565275, %v151
    %v155 = vshrl.u32 2475754826, %v152
    %v156 = vor.u32 %v154, %v155
    %v157 = vshll.u32 2475754826, %v151
    %v158 = vshrl.u32 2131351028, %v152
    %v159 = vor.u32 %v157, %v158
    %v160 = vshll.u32 2131351028, %v151
    %v161 = vshrl.u32 2102212464, %v152
    %v162 = vor.u32 %v160, %v161
    %v163 = vshll.u32 2102212464, %v151
    %v164 = vshrl.u32 920167782, %v152
    %v165 = vor.u32 %v163, %v164
    %v166 = vshll.u32 920167782, %v151
    %v167 = vshrl.u32 1326507024, %v152
    %v168 = vor.u32 %v166, %v167
    %vm169 = vcmp.lt.s32.totalorder %v150, 1
    %vm170 = vcmp.lt.s32.totalorder %v150, 2
    %vm171 = vcmp.lt.s32.totalorder %v150, 3
    %vm172 = vcmp.lt.s32.totalorder %v150, 4
    %v173 = vsel %vm169, %v153, %v156
    %v174 = vsel %vm172, %v162, 2102212464
    %v175 = vsel %vm171, %v159, %v174
    %v176 = vsel %vm170, %v173, %v175
    %v177 = vsel %vm169, %v156, %v159
    %v178 = vsel %vm172, %v165, 920167782
    %v179 = vsel %vm171, %v162, %v178
    %v180 = vsel %vm170, %v177, %v179
    %v181 = vsel %vm169, %v159, %v162
    %v182 = vsel %vm172, %v168, 1326507024
    %v183 = vsel %vm171, %v165, %v182
    %v184 = vsel %vm170, %v181, %v183
    %v185 = vshll.u32 %v145, 8
    %v186 = vmul.u32.u64.compose %v185, %v184
    %v187 = vextract.low.u32 %v186
    %v188 = vextract.high.u32 %v186
    %v189 = vmul.u32.u64.compose %v185, %v180
    %v190 = vextract.low.u32 %v189
    %v191 = vextract.high.u32 %v189
    %v192 = vmul.u32 %v185, %v176
    %v193 = vadd.s32 %v188, %v190
    %vm194 = vc.u32 %v188, %v190
    %v195 = vadd.s32 %v191, 1
    %v196 = vsel %vm194, %v195, %v191
    %v197 = vadd.s32 %v192, %v196
    %v198 = vadd.s32 %v197, 536870912
    %v199 = vshrl.u32 %v198, 30
    %v200 = vshll.u32 %v199, 30
    %v201 = vsub.s32 %v197, %v200
    %vm202 = vcmp.lt.s32.totalorder %v201, 0
    %v203 = vsub.s32 0, %v201
    %v204 = vsel %vm202, %v203, %v201
    %v205 = vclz %v204
    %v206 = vsub.s32 %v205, 2
    %vm207 = vcmp.gt.s32.totalorder 0, %v206
    %v208 = vsel %vm207, 0, %v206
    %v209 = vsub.s32 32, %v208
    %v210 = vshll.u32 %v201, %v208
    %v211 = vshrl.u32 %v193, %v209
    %v212 = vor.u32 %v210, %v211
    %v213 = vsub.s32 4294967266, %v208
    %v214 = vadd.s32 %v213, 127
    %v215 = vshll.u32 %v214, 23
    %v216 = vor.u32 4788187, %v215
    %v217 = vand.u32 2147483647, %v216
    %v219 = vcvt.s32.f32 %v212
    %v220 = vmul.f32 %v219, %v217
    %v221 = vxor.u32 %v220, 2147483648
    %v222 = vsel %vm139, %v221, %v220
    %v223 = vsub.s32 4, %v199
    %v224 = vsel %vm139, %v223, %v199
    %v225 = vsel %vm138, %v32, %v222
    %v226 = vsel %vm138, 0, %v224
    %v227 = vcosq.f32.pop %v225
    %v228 = vsinq.f32.pop %v225
    %vm229 = vweird.f32 %v32
    %v230 = vadd.s32 %v226, 3
    %v231 = vand.u32 %v230, 3
    %vm232 = vcmp.lt.s32.totalorder %v231, 2
    %vm233 = vcmp.eq.s32.totalorder %v231, 0
    %v234 = vxor.u32 %v228, 2147483648
    %v235 = vsel %vm233, %v227, %v234
    %vm236 = vcmp.eq.s32.totalorder %v231, 2
    %v237 = vxor.u32 %v227, 2147483648
    %v238 = vsel %vm236, %v237, %v228
    %v239 = vsel %vm232, %v235, %v238
    %v240 = vsel %vm229, nan, %v239
    %v241 = vand.u32 2147483647, %v31
    %vm242 = vcmp.le.f32.partialorder %v241, 0.7853982
    %vm243 = vcmp.lt.s32.totalorder %v31, 0
    %v244 = vand.u32 %v31, 2139095040
    %v245 = vshrl.u32 %v244, 23
    %v246 = vsub.s32 %v245, 127
    %v247 = vand.u32 2147483647, %v31
    %v248 = vand.u32 %v247, 8388607
    %v249 = vor.u32 %v248, 8388608
    %v250 = vsub.s32 0, %v249
    %v251 = vadd.s32 %v246, 1
    %vm252 = vcmp.gt.s32.totalorder %v251, 0
    %v253 = vsel %vm252, %v251, 0
    %v254 = vshrl.u32 %v253, 5
    %v255 = vand.u32 %v253, 31
    %v256 = vsub.s32 32, %v255
    %v257 = vshrl.u32 683565275, %v256
    %v258 = vshll.u32 683565275, %v255
    %v259 = vshrl.u32 2475754826, %v256
    %v260 = vor.u32 %v258, %v259
    %v261 = vshll.u32 2475754826, %v255
    %v262 = vshrl.u32 2131351028, %v256
    %v263 = vor.u32 %v261, %v262
    %v264 = vshll.u32 2131351028, %v255
    %v265 = vshrl.u32 2102212464, %v256
    %v266 = vor.u32 %v264, %v265
    %v267 = vshll.u32 2102212464, %v255
    %v268 = vshrl.u32 920167782, %v256
    %v269 = vor.u32 %v267, %v268
    %v270 = vshll.u32 920167782, %v255
    %v271 = vshrl.u32 1326507024, %v256
    %v272 = vor.u32 %v270, %v271
    %vm273 = vcmp.lt.s32.totalorder %v254, 1
    %vm274 = vcmp.lt.s32.totalorder %v254, 2
    %vm275 = vcmp.lt.s32.totalorder %v254, 3
    %vm276 = vcmp.lt.s32.totalorder %v254, 4
    %v277 = vsel %vm273, %v257, %v260
    %v278 = vsel %vm276, %v266, 2102212464
    %v279 = vsel %vm275, %v263, %v278
    %v280 = vsel %vm274, %v277, %v279
    %v281 = vsel %vm273, %v260, %v263
    %v282 = vsel %vm276, %v269, 920167782
    %v283 = vsel %vm275, %v266, %v282
    %v284 = vsel %vm274, %v281, %v283
    %v285 = vsel %vm273, %v263, %v266
    %v286 = vsel %vm276, %v272, 1326507024
    %v287 = vsel %vm275, %v269, %v286
    %v288 = vsel %vm274, %v285, %v287
    %v289 = vshll.u32 %v249, 8
    %v290 = vmul.u32.u64.compose %v289, %v288
    %v291 = vextract.low.u32 %v290
    %v292 = vextract.high.u32 %v290
    %v293 = vmul.u32.u64.compose %v289, %v284
    %v294 = vextract.low.u32 %v293
    %v295 = vextract.high.u32 %v293
    %v296 = vmul.u32 %v289, %v280
    %v297 = vadd.s32 %v292, %v294
    %vm298 = vc.u32 %v292, %v294
    %v299 = vadd.s32 %v295, 1
    %v300 = vsel %vm298, %v299, %v295
    %v301 = vadd.s32 %v296, %v300
    %v302 = vadd.s32 %v301, 536870912
    %v303 = vshrl.u32 %v302, 30
    %v304 = vshll.u32 %v303, 30
    %v305 = vsub.s32 %v301, %v304
    %vm306 = vcmp.lt.s32.totalorder %v305, 0
    %v307 = vsub.s32 0, %v305
    %v308 = vsel %vm306, %v307, %v305
    %v309 = vclz %v308
    %v310 = vsub.s32 %v309, 2
    %vm311 = vcmp.gt.s32.totalorder 0, %v310
    %v312 = vsel %vm311, 0, %v310
    %v313 = vsub.s32 32, %v312
    %v314 = vshll.u32 %v305, %v312
    %v315 = vshrl.u32 %v297, %v313
    %v316 = vor.u32 %v314, %v315
    %v317 = vsub.s32 4294967266, %v312
    %v318 = vadd.s32 %v317, 127
    %v319 = vshll.u32 %v318, 23
    %v320 = vor.u32 4788187, %v319
    %v321 = vand.u32 2147483647, %v320
    %v323 = vcvt.s32.f32 %v316
    %v324 = vmul.f32 %v323, %v321
    %v325 = vxor.u32 %v324, 2147483648
    %v326 = vsel %vm243, %v325, %v324
    %v327 = vsub.s32 4, %v303
    %v328 = vsel %vm243, %v327, %v303
    %v329 = vsel %vm242, %v31, %v326
    %v330 = vsel %vm242, 0, %v328
    %v331 = vcosq.f32.pop %v329
    %v332 = vsinq.f32.pop %v329
    %vm333 = vweird.f32 %v31
    %v334 = vand.u32 %v330, 3
    %vm335 = vcmp.lt.s32.totalorder %v334, 2
    %vm336 = vcmp.eq.s32.totalorder %v334, 0
    %v337 = vxor.u32 %v332, 2147483648
    %v338 = vsel %vm336, %v331, %v337
    %vm339 = vcmp.eq.s32.totalorder %v334, 2
    %v340 = vxor.u32 %v331, 2147483648
    %v341 = vsel %vm339, %v340, %v332
    %v342 = vsel %vm335, %v338, %v341
    %v343 = vsel %vm333, nan, %v342
    %v344 = vand.u32 2147483647, %v32
    %vm345 = vcmp.le.f32.partialorder %v344, 0.7853982
    %vm346 = vcmp.lt.s32.totalorder %v32, 0
    %v347 = vand.u32 %v32, 2139095040
    %v348 = vshrl.u32 %v347, 23
    %v349 = vsub.s32 %v348, 127
    %v350 = vand.u32 2147483647, %v32
    %v351 = vand.u32 %v350, 8388607
    %v352 = vor.u32 %v351, 8388608
    %v353 = vsub.s32 0, %v352
    %v354 = vadd.s32 %v349, 1
    %vm355 = vcmp.gt.s32.totalorder %v354, 0
    %v356 = vsel %vm355, %v354, 0
    %v357 = vshrl.u32 %v356, 5
    %v358 = vand.u32 %v356, 31
    %v359 = vsub.s32 32, %v358
    %v360 = vshrl.u32 683565275, %v359
    %v361 = vshll.u32 683565275, %v358
    %v362 = vshrl.u32 2475754826, %v359
    %v363 = vor.u32 %v361, %v362
    %v364 = vshll.u32 2475754826, %v358
    %v365 = vshrl.u32 2131351028, %v359
    %v366 = vor.u32 %v364, %v365
    %v367 = vshll.u32 2131351028, %v358
    %v368 = vshrl.u32 2102212464, %v359
    %v369 = vor.u32 %v367, %v368
    %v370 = vshll.u32 2102212464, %v358
    %v371 = vshrl.u32 920167782, %v359
    %v372 = vor.u32 %v370, %v371
    %v373 = vshll.u32 920167782, %v358
    %v374 = vshrl.u32 1326507024, %v359
    %v375 = vor.u32 %v373, %v374
    %vm376 = vcmp.lt.s32.totalorder %v357, 1
    %vm377 = vcmp.lt.s32.totalorder %v357, 2
    %vm378 = vcmp.lt.s32.totalorder %v357, 3
    %vm379 = vcmp.lt.s32.totalorder %v357, 4
    %v380 = vsel %vm376, %v360, %v363
    %v381 = vsel %vm379, %v369, 2102212464
    %v382 = vsel %vm378, %v366, %v381
    %v383 = vsel %vm377, %v380, %v382
    %v384 = vsel %vm376, %v363, %v366
    %v385 = vsel %vm379, %v372, 920167782
    %v386 = vsel %vm378, %v369, %v385
    %v387 = vsel %vm377, %v384, %v386
    %v388 = vsel %vm376, %v366, %v369
    %v389 = vsel %vm379, %v375, 1326507024
    %v390 = vsel %vm378, %v372, %v389
    %v391 = vsel %vm377, %v388, %v390
    %v392 = vshll.u32 %v352, 8
    %v393 = vmul.u32.u64.compose %v392, %v391
    %v394 = vextract.low.u32 %v393
    %v395 = vextract.high.u32 %v393
    %v396 = vmul.u32.u64.compose %v392, %v387
    %v397 = vextract.low.u32 %v396
    %v398 = vextract.high.u32 %v396
    %v399 = vmul.u32 %v392, %v383
    %v400 = vadd.s32 %v395, %v397
    %vm401 = vc.u32 %v395, %v397
    %v402 = vadd.s32 %v398, 1
    %v403 = vsel %vm401, %v402, %v398
    %v404 = vadd.s32 %v399, %v403
    %v405 = vadd.s32 %v404, 536870912
    %v406 = vshrl.u32 %v405, 30
    %v407 = vshll.u32 %v406, 30
    %v408 = vsub.s32 %v404, %v407
    %vm409 = vcmp.lt.s32.totalorder %v408, 0
    %v410 = vsub.s32 0, %v408
    %v411 = vsel %vm409, %v410, %v408
    %v412 = vclz %v411
    %v413 = vsub.s32 %v412, 2
    %vm414 = vcmp.gt.s32.totalorder 0, %v413
    %v415 = vsel %vm414, 0, %v413
    %v416 = vsub.s32 32, %v415
    %v417 = vshll.u32 %v408, %v415
    %v418 = vshrl.u32 %v400, %v416
    %v419 = vor.u32 %v417, %v418
    %v420 = vsub.s32 4294967266, %v415
    %v421 = vadd.s32 %v420, 127
    %v422 = vshll.u32 %v421, 23
    %v423 = vor.u32 4788187, %v422
    %v424 = vand.u32 2147483647, %v423
    %v426 = vcvt.s32.f32 %v419
    %v427 = vmul.f32 %v426, %v424
    %v428 = vxor.u32 %v427, 2147483648
    %v429 = vsel %vm346, %v428, %v427
    %v430 = vsub.s32 4, %v406
    %v431 = vsel %vm346, %v430, %v406
    %v432 = vsel %vm345, %v32, %v429
    %v433 = vsel %vm345, 0, %v431
    %v434 = vcosq.f32.pop %v432
    %v435 = vsinq.f32.pop %v432
    %vm436 = vweird.f32 %v32
    %v437 = vand.u32 %v433, 3
    %vm438 = vcmp.lt.s32.totalorder %v437, 2
    %vm439 = vcmp.eq.s32.totalorder %v437, 0
    %v440 = vxor.u32 %v435, 2147483648
    %v441 = vsel %vm439, %v434, %v440
    %vm442 = vcmp.eq.s32.totalorder %v437, 2
    %v443 = vxor.u32 %v434, 2147483648
    %v444 = vsel %vm442, %v443, %v435
    %v445 = vsel %vm438, %v441, %v444
    %v446 = vsel %vm436, nan, %v445
    %vm447 = vcmask 130048
    %448 = vst.msk [vmem:[#allocation2] sm:$0xff] %vm447, %v343
    %449 = vst.msk [vmem:[#allocation2 + $0x8] sm:$0xff] %vm447, %v446
    %452 = vrot.lane.b32.xlu0 %v136, 16
    %v453 = vpop.permute.xlu0 %452
    %454 = vrot.lane.b32.xlu0 %v240, 16
    %v455 = vpop.permute.xlu0 %454
    %vm458 = vcmask 261248
    %459 = vst.msk [vmem:[#allocation2] sm:$0xff] %vm458, %v453
    %460 = vst.msk [vmem:[#allocation2 + $0x8] sm:$0xff] %vm458, %v455
    // Predicated region
    $region10: #{tpu_custom_call.1} parent=1 // pred_check
      _
    $region11: #{tpu_custom_call.1} parent=1 // pred_check_branch
      %462 = sbr.rel (0) target = $region13
    $region12: #{tpu_custom_call.1} parent=1 // pred_region
      %s464 = ssub.s32 256, 256
      %465 = vsyncadd [#allocation3], %s464
      %s466 = sshll.u32 [#allocation2], 4
      %s467 = int_to_ptr.vmem [resolvable:$true] %s466
      %472 = dma.vmem_to_hbm [thread:$0]  %s467, 256, %s2, [#allocation3], 128, 128, 8
    $region13: #{tpu_custom_call.1} parent=1 // pred_fallthru
      _
    // Predicated region
    $region14: #{tpu_custom_call.1} parent=1 // pred_check
      _
    $region15: #{tpu_custom_call.1} parent=1 // pred_check_branch
      %474 = sbr.rel (0) target = $region17
    $region16: #{tpu_custom_call.1} parent=1 // pred_region
      %475 = dma.done [#allocation3], 256
    $region17: #{tpu_custom_call.1} parent=1 // pred_fallthru
      _
    %476 = vsyncpa [#allocation3], 1

</llo_original>
